<compile_context>
chip_gen: v6e
topology: v6e:2x2x1
jax: 0.10.0
libtpu: 0.0.40
codegen_flags: <defaults>
</compile_context>

<pallas_src>
import functools
import math

import jax
import jax.numpy as jnp
from jax.experimental import pallas as pl
from jax.experimental.pallas import tpu as pltpu

LN_EPS = 1e-5


def _round_up(x, m):
    return (x + m - 1) // m * m


def _ln_onepass(h, gamma, beta, n_true):
    """One-pass LayerNorm over the last dim.

    `h` may be lane-padded with zeros beyond `n_true`; the sums are therefore
    exact for the true channels and we divide by the true width. gamma/beta
    are zero in the padded lanes, so padded output lanes are exactly 0.
    """
    inv_n = 1.0 / float(n_true)
    s = jnp.sum(h, axis=-1, keepdims=True)
    s2 = jnp.sum(h * h, axis=-1, keepdims=True)
    mean = s * inv_n
    var = jnp.maximum(s2 * inv_n - mean * mean, 0.0)   # clamp for rsqrt safety
    return (h - mean) * jax.lax.rsqrt(var + LN_EPS) * gamma + beta


def actor_kernel(x_ref, w1_ref, w2_ref, wmu_ref, vec_ref, mu_ref, *,
                 h_true, h_pad, mu_pad):
    mxu_dt = w1_ref.dtype                      # f32 or bf16 MXU operands
    x = x_ref[...]                             # (TB, num_inputs) f32
    vec = vec_ref[...]                         # (8, SLAB_W) f32, lane-padded

    # Row-only unpacking of the packed per-channel vectors; the lane slices
    # below are at 128-multiples (tile-aligned) and are no-ops when
    # SLAB_W == h_pad == mu_pad.
    b1, g1, be1 = vec[0:1, :h_pad], vec[1:2, :h_pad], vec[2:3, :h_pad]
    b2, g2, be2 = vec[3:4, :h_pad], vec[4:5, :h_pad], vec[5:6, :h_pad]
    bmu = vec[6:7, :mu_pad]

    # linear1 + ln1 + relu   (f32 accumulate, f32 elementwise)
    h = jnp.dot(x.astype(mxu_dt), w1_ref[...],
                preferred_element_type=jnp.float32) + b1
    h = jnp.maximum(_ln_onepass(h, g1, be1, h_true), 0.0)

    # linear2 + ln2 + relu
    h = jnp.dot(h.astype(mxu_dt), w2_ref[...],
                preferred_element_type=jnp.float32) + b2
    h = jnp.maximum(_ln_onepass(h, g2, be2, h_true), 0.0)

    # mu head (lane-dense, mu_pad columns) + tanh
    mu = jnp.tanh(jnp.dot(h.astype(mxu_dt), wmu_ref[...],
                          preferred_element_type=jnp.float32) + bmu)
    mu_ref[...] = mu.astype(mu_ref.dtype)


def actor_forward(inputs, packed, *, block_b=512):
    B, num_inputs = inputs.shape
    meta = packed["meta"]
    h_true, h_pad = meta["h_true"], meta["h_pad"]
    mu_pad, num_outputs = meta["mu_pad"], meta["num_outputs"]
    w1, w2, wmu, vec = packed["w1"], packed["w2"], packed["wmu"], packed["vec"]

    # --- batch tiling: multiple-of-8 tiles, no partial last tile, and >=2
    # grid steps when the batch allows it (v7x megacore sharding). -----------
    n_steps = max(2, pl.cdiv(B, block_b))
    TB = min(_round_up(pl.cdiv(B, n_steps), 8), _round_up(B, 8))
    B_pad = _round_up(B, TB)
    if B_pad != B:
        inputs = jnp.pad(inputs, ((0, B_pad - B), (0, 0)))
    grid = (B_pad // TB,)

    kernel = functools.partial(actor_kernel, h_true=h_true, h_pad=h_pad,
                               mu_pad=mu_pad)

    # Advisory cost estimate so XLA overlaps this small call with neighbors.
    flops = 2 * B_pad * (num_inputs * h_pad + h_pad * h_pad + h_pad * mu_pad)
    transcendentals = B_pad * (2 + mu_pad)            # 2 rsqrt + tanh row
    bytes_accessed = (inputs.size * inputs.dtype.itemsize
                      + w1.size * w1.dtype.itemsize
                      + w2.size * w2.dtype.itemsize
                      + wmu.size * wmu.dtype.itemsize
                      + vec.size * vec.dtype.itemsize
                      + B_pad * mu_pad * 4)

    mu_padded = pl.pallas_call(
        kernel,
        out_shape=jax.ShapeDtypeStruct((B_pad, mu_pad), jnp.float32),
        grid=grid,
        in_specs=[
            pl.BlockSpec((TB, num_inputs), lambda i: (i, 0)),   # activations
            pl.BlockSpec(w1.shape, lambda i: (0, 0)),           # resident
            pl.BlockSpec(w2.shape, lambda i: (0, 0)),           # resident
            pl.BlockSpec(wmu.shape, lambda i: (0, 0)),          # resident
            pl.BlockSpec(vec.shape, lambda i: (0, 0)),          # resident
        ],
        out_specs=pl.BlockSpec((TB, mu_pad), lambda i: (i, 0)),
        compiler_params=pltpu.CompilerParams(
            dimension_semantics=("parallel",),
            vmem_limit_bytes=32 * 1024 * 1024),
        cost_estimate=pl.CostEstimate(flops=flops,
                                      transcendentals=transcendentals,
                                      bytes_accessed=bytes_accessed),
    )(inputs, w1, w2, wmu, vec)

    return mu_padded[:B, :num_outputs]


def init_params(key, num_inputs, hidden_size, num_outputs):
    """PyTorch nn.Linear default init: U(-1/sqrt(fan_in), 1/sqrt(fan_in))."""
    ks = jax.random.split(key, 6)

    def lin(kw, kb, fan_in, fan_out):
        bound = 1.0 / math.sqrt(fan_in)
        w = jax.random.uniform(kw, (fan_in, fan_out), jnp.float32, -bound, bound)
        b = jax.random.uniform(kb, (1, fan_out), jnp.float32, -bound, bound)
        return w, b

    w1, b1 = lin(ks[0], ks[1], num_inputs, hidden_size)
    w2, b2 = lin(ks[2], ks[3], hidden_size, hidden_size)
    wmu, bmu = lin(ks[4], ks[5], hidden_size, num_outputs)
    wmu, bmu = wmu * 0.1, bmu * 0.1     # self.mu.{weight,bias}.data.mul_(0.1)

    return dict(
        w1=w1, b1=b1,
        g1=jnp.ones((1, hidden_size), jnp.float32),
        be1=jnp.zeros((1, hidden_size), jnp.float32),
        w2=w2, b2=b2,
        g2=jnp.ones((1, hidden_size), jnp.float32),
        be2=jnp.zeros((1, hidden_size), jnp.float32),
        wmu=wmu, bmu=bmu,
    )


def pack_params(p, *, lane_multiple=128, mxu_dtype=jnp.float32):
    """Lane-pad hidden dim + mu head, pack per-channel vectors into one slab.

    Padded weight rows/cols and padded gamma/beta/bias lanes are zero, so the
    kernel's padded lanes stay exactly zero through LN/ReLU and contribute
    nothing to subsequent matmuls. `lane_multiple=256` is a further option on
    v6e/v7x (2x256^2 MXU); 128 is the universal safe choice.
    """
    num_inputs, H = p["w1"].shape
    num_outputs = p["wmu"].shape[1]
    h_pad = _round_up(H, lane_multiple)
    mu_pad = _round_up(num_outputs, 128)
    slab_w = max(h_pad, mu_pad)

    w1 = jnp.zeros((num_inputs, h_pad), jnp.float32).at[:, :H].set(p["w1"])
    w2 = jnp.zeros((h_pad, h_pad), jnp.float32).at[:H, :H].set(p["w2"])
    wmu = jnp.zeros((h_pad, mu_pad), jnp.float32).at[:H, :num_outputs].set(p["wmu"])

    vec = jnp.zeros((8, slab_w), jnp.float32)
    for r, v in enumerate([p["b1"], p["g1"], p["be1"],
                           p["b2"], p["g2"], p["be2"]]):
        vec = vec.at[r, :H].set(v[0])
    vec = vec.at[6, :num_outputs].set(p["bmu"][0])

    return dict(
        w1=w1.astype(mxu_dtype), w2=w2.astype(mxu_dtype),
        wmu=wmu.astype(mxu_dtype), vec=vec,
        meta=dict(h_true=H, h_pad=h_pad, mu_pad=mu_pad,
                  num_outputs=num_outputs),
    )


def actor_reference(inputs, p):
    def ln(h, g, b):
        mu = jnp.mean(h, axis=-1, keepdims=True)
        var = jnp.mean((h - mu) ** 2, axis=-1, keepdims=True)
        return (h - mu) * jax.lax.rsqrt(var + LN_EPS) * g + b

    h = jnp.maximum(ln(inputs @ p["w1"] + p["b1"], p["g1"], p["be1"]), 0.0)
    h = jnp.maximum(ln(h @ p["w2"] + p["b2"], p["g2"], p["be2"]), 0.0)
    return jnp.tanh(h @ p["wmu"] + p["bmu"])


if __name__ == "__main__":
    B, NUM_INPUTS, HIDDEN, NUM_ACTIONS = 8, 16, 32, 4

    key = jax.random.PRNGKey(0)
    k_in, k_par = jax.random.split(key)
    inputs = jax.random.normal(k_in, (B, NUM_INPUTS), jnp.float32)
    params = init_params(k_par, NUM_INPUTS, HIDDEN, NUM_ACTIONS)
    mu_ref = actor_reference(inputs, params)

    # f32 MXU operands: exact-precision path (and the safe v5e choice).
    packed_f32 = pack_params(params, mxu_dtype=jnp.float32)
    mu = jax.block_until_ready(actor_forward(inputs, packed_f32))
    assert mu.shape == (B, NUM_ACTIONS)
    assert jnp.allclose(mu, mu_ref, atol=1e-5, rtol=1e-5), (mu, mu_ref)

    # bf16 MXU operands: v6e/v7x throughput path (f32 accumulate + f32 LN).
    packed_bf16 = pack_params(params, mxu_dtype=jnp.bfloat16)
    mu_bf16 = jax.block_until_ready(actor_forward(inputs, packed_bf16))
    assert mu_bf16.shape == (B, NUM_ACTIONS)
    assert jnp.allclose(mu_bf16, mu_ref, atol=3e-2, rtol=3e-2), (mu_bf16, mu_ref)

    print("KERNEL_OK")
</pallas_src>

<mosaic_0001>
module attributes {stable_mosaic.version = 11 : i64} {
  func.func @actor_kernel(%arg0: i32, %arg1: memref<8x16xf32, #tpu.memory_space<vmem>>, %arg2: memref<16x128xf32, #tpu.memory_space<vmem>>, %arg3: memref<128x128xf32, #tpu.memory_space<vmem>>, %arg4: memref<128x128xf32, #tpu.memory_space<vmem>>, %arg5: memref<8x128xf32, #tpu.memory_space<vmem>>, %arg6: memref<8x128xf32, #tpu.memory_space<vmem>>) attributes {dimension_semantics = [#tpu.dimension_semantics<parallel>], iteration_bounds = array<i64: 1>, scalar_prefetch = 0 : i64, scratch_operands = 0 : i64, tpu.core_type = #tpu.core_type<tc>, window_params = [{transform_indices = @transform_0, window_bounds = array<i64: 8, 16>}, {pipeline_mode = #tpu.pipeline_mode<synchronous>, transform_indices = @transform_1, window_bounds = array<i64: 16, 128>}, {pipeline_mode = #tpu.pipeline_mode<synchronous>, transform_indices = @transform_2, window_bounds = array<i64: 128, 128>}, {pipeline_mode = #tpu.pipeline_mode<synchronous>, transform_indices = @transform_3, window_bounds = array<i64: 128, 128>}, {pipeline_mode = #tpu.pipeline_mode<synchronous>, transform_indices = @transform_4, window_bounds = array<i64: 8, 128>}, {transform_indices = @transform_5, window_bounds = array<i64: 8, 128>}]} {
    %c0 = arith.constant 0 : index
    %c0_0 = arith.constant 0 : index
    %0 = vector.load %arg1[%c0, %c0_0] : memref<8x16xf32, #tpu.memory_space<vmem>>, vector<8x16xf32>
    %c0_1 = arith.constant 0 : index
    %c0_2 = arith.constant 0 : index
    %1 = vector.load %arg5[%c0_1, %c0_2] : memref<8x128xf32, #tpu.memory_space<vmem>>, vector<8x128xf32>
    %2 = vector.extract_strided_slice %1 {offsets = [0, 0], sizes = [1, 128], strides = [1, 1]} : vector<8x128xf32> to vector<1x128xf32>
    %3 = vector.extract_strided_slice %1 {offsets = [1, 0], sizes = [1, 128], strides = [1, 1]} : vector<8x128xf32> to vector<1x128xf32>
    %4 = vector.extract_strided_slice %1 {offsets = [2, 0], sizes = [1, 128], strides = [1, 1]} : vector<8x128xf32> to vector<1x128xf32>
    %5 = vector.extract_strided_slice %1 {offsets = [3, 0], sizes = [1, 128], strides = [1, 1]} : vector<8x128xf32> to vector<1x128xf32>
    %6 = vector.extract_strided_slice %1 {offsets = [4, 0], sizes = [1, 128], strides = [1, 1]} : vector<8x128xf32> to vector<1x128xf32>
    %7 = vector.extract_strided_slice %1 {offsets = [5, 0], sizes = [1, 128], strides = [1, 1]} : vector<8x128xf32> to vector<1x128xf32>
    %8 = vector.extract_strided_slice %1 {offsets = [6, 0], sizes = [1, 128], strides = [1, 1]} : vector<8x128xf32> to vector<1x128xf32>
    %c0_3 = arith.constant 0 : index
    %c0_4 = arith.constant 0 : index
    %9 = vector.load %arg2[%c0_3, %c0_4] : memref<16x128xf32, #tpu.memory_space<vmem>>, vector<16x128xf32>
    %cst = arith.constant dense<0.000000e+00> : vector<8x128xf32>
    %10 = tpu.matmul %0, %9, %cst {dimension_numbers = #tpu.dot_dimension_numbers<[1], [0], [0], [1], [0, 0, 1, 1], [], []>} : vector<8x16xf32>, vector<16x128xf32>, vector<8x128xf32> -> vector<8x128xf32>
    %11 = vector.broadcast %2 : vector<1x128xf32> to vector<8x128xf32>
    %12 = arith.addf %10, %11 : vector<8x128xf32>
    %cst_5 = arith.constant dense<0.000000e+00> : vector<8xf32>
    %13 = vector.multi_reduction <add>, %12, %cst_5 [1] : vector<8x128xf32> to vector<8xf32>
    %14 = vector.shape_cast %13 : vector<8xf32> to vector<8x1xf32>
    %15 = arith.mulf %12, %12 : vector<8x128xf32>
    %cst_6 = arith.constant dense<0.000000e+00> : vector<8xf32>
    %16 = vector.multi_reduction <add>, %15, %cst_6 [1] : vector<8x128xf32> to vector<8xf32>
    %17 = vector.shape_cast %16 : vector<8xf32> to vector<8x1xf32>
    %cst_7 = arith.constant 3.125000e-02 : f32
    %18 = vector.broadcast %cst_7 : f32 to vector<8x1xf32>
    %19 = arith.mulf %14, %18 : vector<8x1xf32>
    %cst_8 = arith.constant 3.125000e-02 : f32
    %20 = vector.broadcast %cst_8 : f32 to vector<8x1xf32>
    %21 = arith.mulf %17, %20 : vector<8x1xf32>
    %22 = arith.mulf %19, %19 : vector<8x1xf32>
    %23 = arith.subf %21, %22 : vector<8x1xf32>
    %cst_9 = arith.constant 0.000000e+00 : f32
    %24 = vector.broadcast %cst_9 : f32 to vector<8x1xf32>
    %25 = arith.maximumf %23, %24 : vector<8x1xf32>
    %26 = vector.broadcast %19 : vector<8x1xf32> to vector<8x128xf32>
    %27 = arith.subf %12, %26 : vector<8x128xf32>
    %cst_10 = arith.constant 9.99999974E-6 : f32
    %28 = vector.broadcast %cst_10 : f32 to vector<8x1xf32>
    %29 = arith.addf %25, %28 : vector<8x1xf32>
    %30 = math.rsqrt %29 : vector<8x1xf32>
    %31 = vector.broadcast %30 : vector<8x1xf32> to vector<8x128xf32>
    %32 = arith.mulf %27, %31 : vector<8x128xf32>
    %33 = vector.broadcast %3 : vector<1x128xf32> to vector<8x128xf32>
    %34 = arith.mulf %32, %33 : vector<8x128xf32>
    %35 = vector.broadcast %4 : vector<1x128xf32> to vector<8x128xf32>
    %36 = arith.addf %34, %35 : vector<8x128xf32>
    %cst_11 = arith.constant 0.000000e+00 : f32
    %37 = vector.broadcast %cst_11 : f32 to vector<8x128xf32>
    %38 = arith.maximumf %36, %37 : vector<8x128xf32>
    %c0_12 = arith.constant 0 : index
    %c0_13 = arith.constant 0 : index
    %39 = vector.load %arg3[%c0_12, %c0_13] : memref<128x128xf32, #tpu.memory_space<vmem>>, vector<128x128xf32>
    %cst_14 = arith.constant dense<0.000000e+00> : vector<8x128xf32>
    %40 = tpu.matmul %38, %39, %cst_14 {dimension_numbers = #tpu.dot_dimension_numbers<[1], [0], [0], [1], [0, 0, 1, 1], [], []>} : vector<8x128xf32>, vector<128x128xf32>, vector<8x128xf32> -> vector<8x128xf32>
    %41 = vector.broadcast %5 : vector<1x128xf32> to vector<8x128xf32>
    %42 = arith.addf %40, %41 : vector<8x128xf32>
    %cst_15 = arith.constant dense<0.000000e+00> : vector<8xf32>
    %43 = vector.multi_reduction <add>, %42, %cst_15 [1] : vector<8x128xf32> to vector<8xf32>
    %44 = vector.shape_cast %43 : vector<8xf32> to vector<8x1xf32>
    %45 = arith.mulf %42, %42 : vector<8x128xf32>
    %cst_16 = arith.constant dense<0.000000e+00> : vector<8xf32>
    %46 = vector.multi_reduction <add>, %45, %cst_16 [1] : vector<8x128xf32> to vector<8xf32>
    %47 = vector.shape_cast %46 : vector<8xf32> to vector<8x1xf32>
    %cst_17 = arith.constant 3.125000e-02 : f32
    %48 = vector.broadcast %cst_17 : f32 to vector<8x1xf32>
    %49 = arith.mulf %44, %48 : vector<8x1xf32>
    %cst_18 = arith.constant 3.125000e-02 : f32
    %50 = vector.broadcast %cst_18 : f32 to vector<8x1xf32>
    %51 = arith.mulf %47, %50 : vector<8x1xf32>
    %52 = arith.mulf %49, %49 : vector<8x1xf32>
    %53 = arith.subf %51, %52 : vector<8x1xf32>
    %cst_19 = arith.constant 0.000000e+00 : f32
    %54 = vector.broadcast %cst_19 : f32 to vector<8x1xf32>
    %55 = arith.maximumf %53, %54 : vector<8x1xf32>
    %56 = vector.broadcast %49 : vector<8x1xf32> to vector<8x128xf32>
    %57 = arith.subf %42, %56 : vector<8x128xf32>
    %cst_20 = arith.constant 9.99999974E-6 : f32
    %58 = vector.broadcast %cst_20 : f32 to vector<8x1xf32>
    %59 = arith.addf %55, %58 : vector<8x1xf32>
    %60 = math.rsqrt %59 : vector<8x1xf32>
    %61 = vector.broadcast %60 : vector<8x1xf32> to vector<8x128xf32>
    %62 = arith.mulf %57, %61 : vector<8x128xf32>
    %63 = vector.broadcast %6 : vector<1x128xf32> to vector<8x128xf32>
    %64 = arith.mulf %62, %63 : vector<8x128xf32>
    %65 = vector.broadcast %7 : vector<1x128xf32> to vector<8x128xf32>
    %66 = arith.addf %64, %65 : vector<8x128xf32>
    %cst_21 = arith.constant 0.000000e+00 : f32
    %67 = vector.broadcast %cst_21 : f32 to vector<8x128xf32>
    %68 = arith.maximumf %66, %67 : vector<8x128xf32>
    %c0_22 = arith.constant 0 : index
    %c0_23 = arith.constant 0 : index
    %69 = vector.load %arg4[%c0_22, %c0_23] : memref<128x128xf32, #tpu.memory_space<vmem>>, vector<128x128xf32>
    %cst_24 = arith.constant dense<0.000000e+00> : vector<8x128xf32>
    %70 = tpu.matmul %68, %69, %cst_24 {dimension_numbers = #tpu.dot_dimension_numbers<[1], [0], [0], [1], [0, 0, 1, 1], [], []>} : vector<8x128xf32>, vector<128x128xf32>, vector<8x128xf32> -> vector<8x128xf32>
    %71 = vector.broadcast %8 : vector<1x128xf32> to vector<8x128xf32>
    %72 = arith.addf %70, %71 : vector<8x128xf32>
    %73 = math.tanh %72 : vector<8x128xf32>
    %c0_25 = arith.constant 0 : index
    %c0_26 = arith.constant 0 : index
    %74 = vector.load %arg6[%c0_25, %c0_26] : memref<8x128xf32, #tpu.memory_space<vmem>>, vector<8x128xf32>
    tpu.vector_store %arg6[%c0_25, %c0_26], %73 {strides = array<i32>} : memref<8x128xf32, #tpu.memory_space<vmem>>, vector<8x128xf32>,
    return
  }
  func.func @transform_0(%arg0: i32) -> (i32, i32) {
    %c0_i32 = arith.constant 0 : i32
    %c0_i32_0 = arith.constant 0 : i32
    return %arg0, %c0_i32 : i32, i32
  }
  func.func @transform_1(%arg0: i32) -> (i32, i32) {
    %c0_i32 = arith.constant 0 : i32
    %c0_i32_0 = arith.constant 0 : i32
    %c0_i32_1 = arith.constant 0 : i32
    return %c0_i32, %c0_i32_0 : i32, i32
  }
  func.func @transform_2(%arg0: i32) -> (i32, i32) {
    %c0_i32 = arith.constant 0 : i32
    %c0_i32_0 = arith.constant 0 : i32
    %c0_i32_1 = arith.constant 0 : i32
    return %c0_i32, %c0_i32_0 : i32, i32
  }
  func.func @transform_3(%arg0: i32) -> (i32, i32) {
    %c0_i32 = arith.constant 0 : i32
    %c0_i32_0 = arith.constant 0 : i32
    %c0_i32_1 = arith.constant 0 : i32
    return %c0_i32, %c0_i32_0 : i32, i32
  }
  func.func @transform_4(%arg0: i32) -> (i32, i32) {
    %c0_i32 = arith.constant 0 : i32
    %c0_i32_0 = arith.constant 0 : i32
    %c0_i32_1 = arith.constant 0 : i32
    return %c0_i32, %c0_i32_0 : i32, i32
  }
  func.func @transform_5(%arg0: i32) -> (i32, i32) {
    %c0_i32 = arith.constant 0 : i32
    %c0_i32_0 = arith.constant 0 : i32
    return %arg0, %c0_i32 : i32, i32
  }
}

</mosaic_0001>

<llo_original>
// kernel: tpu_custom_call.1
$region0: #{tpu_custom_call.1}
  #allocation0 [shape = 'u32[]', space=smem, size = 0x4, offset = 0x4, fixed_abs, tag = 'smem constant byte address 0x4 - core index']
  #allocation1 [shape = 'u32[144,128]{1,0:T(1,128)}', space=vmem, size = 0x12000, scoped, tag = 'internal scratch']
  %s0 = inlined_call_operand.hbm [shape: f32[8,16], index: 0, kind: input, shape index: {}]
  %s1 = inlined_call_operand.hbm [shape: f32[16,128], index: 1, kind: input, shape index: {}]
  %s2 = inlined_call_operand.hbm [shape: f32[128,128], index: 2, kind: input, shape index: {}]
  %s3 = inlined_call_operand.hbm [shape: f32[128,128], index: 3, kind: input, shape index: {}]
  %s4 = inlined_call_operand.hbm [shape: f32[8,128], index: 4, kind: input, shape index: {}]
  %s5 = inlined_call_operand.hbm [shape: f32[8,128], index: 5, kind: output, shape index: {}]
  %s6 = sld [smem:[#allocation0]]
  $region50: #{tpu_custom_call.1} parent=0
    _
  %s8 = ssub.s32 1, %s6
  %s9 = scalar_select 0, %s8, %s6
  $region1: #{tpu_custom_call.1} parent=0
    #allocation2 [shape = 'u8[4096]{0}', space=vmem, size = 0x1000, scoped, tag = 'input window, operand 0, single buffered']
    #allocation3 [shape = 's32[1]{0}', space=sflag, size = 0x4, scoped, tag = 'scoped memory for tpu_custom_call.1']
    #allocation4 [shape = 's32[1]{0}', space=sflag, size = 0x4, scoped, tag = 'scoped memory for tpu_custom_call.1']
    #allocation5 [shape = 'u8[8192]{0}', space=vmem, size = 0x2000, scoped, tag = 'input window, operand 1, single buffered']
    #allocation6 [shape = 's32[1]{0}', space=sflag, size = 0x4, scoped, tag = 'scoped memory for tpu_custom_call.1']
    #allocation7 [shape = 'u8[65536]{0}', space=vmem, size = 0x10000, scoped, tag = 'input window, operand 2, single buffered']
    #allocation8 [shape = 'u8[65536]{0}', space=vmem, size = 0x10000, scoped, tag = 'input window, operand 3, single buffered']
    #allocation9 [shape = 's32[1]{0}', space=sflag, size = 0x4, scoped, tag = 'scoped memory for tpu_custom_call.1']
    #allocation10 [shape = 'u8[4096]{0}', space=vmem, size = 0x1000, scoped, tag = 'input window, operand 4, single buffered']
    #allocation11 [shape = 'u8[4096]{0}', space=vmem, size = 0x1000, scoped, tag = 'output window, operand 0, single buffered']
    %10 = vsyncpa [#allocation3], 0
    %11 = vsyncpa [#allocation6], 0
    %12 = vsyncpa [#allocation9], 0
    %13 = vsyncpa [#allocation4], 0
    // Predicated region
    $region2: #{tpu_custom_call.1} parent=1 // pred_check
      _
    $region3: #{tpu_custom_call.1} parent=1 // pred_check_branch
      %15 = sbr.rel (0) target = $region5
    $region4: #{tpu_custom_call.1} parent=1 // pred_region
      %s17 = ssub.s32 128, 128
      %18 = vsyncadd [#allocation3], %s17
      %s20 = sshll.u32 [#allocation2], 4
      %s21 = int_to_ptr.vmem [resolvable:$true] %s20
      %23 = dma.hbm_to_vmem [thread:$0]  %s0, 128, %s21, [#allocation3]
    $region5: #{tpu_custom_call.1} parent=1 // pred_fallthru
      _
    // Predicated region
    $region6: #{tpu_custom_call.1} parent=1 // pred_check
      _
    $region7: #{tpu_custom_call.1} parent=1 // pred_check_branch
      %25 = sbr.rel (0) target = $region9
    $region8: #{tpu_custom_call.1} parent=1 // pred_region
      %s27 = ssub.s32 256, 256
      %28 = vsyncadd [#allocation6], %s27
      %s29 = sshll.u32 [#allocation5], 4
      %s30 = int_to_ptr.vmem [resolvable:$true] %s29
      %35 = dma.hbm_to_vmem [thread:$0]  %s1, 256, %s30, [#allocation6], 128, 128, 8
    $region9: #{tpu_custom_call.1} parent=1 // pred_fallthru
      _
    // Predicated region
    $region10: #{tpu_custom_call.1} parent=1 // pred_check
      _
    $region11: #{tpu_custom_call.1} parent=1 // pred_check_branch
      %37 = sbr.rel (0) target = $region13
    $region12: #{tpu_custom_call.1} parent=1 // pred_region
      %s39 = ssub.s32 2048, 2048
      %40 = vsyncadd [#allocation6], %s39
      %s41 = sshll.u32 [#allocation7], 4
      %s42 = int_to_ptr.vmem [resolvable:$true] %s41
      %47 = dma.hbm_to_vmem [thread:$0]  %s2, 2048, %s42, [#allocation6], 128, 128, 8
    $region13: #{tpu_custom_call.1} parent=1 // pred_fallthru
      _
    // Predicated region
    $region14: #{tpu_custom_call.1} parent=1 // pred_check
      _
    $region15: #{tpu_custom_call.1} parent=1 // pred_check_branch
      %49 = sbr.rel (0) target = $region17
    $region16: #{tpu_custom_call.1} parent=1 // pred_region
      %s51 = ssub.s32 2048, 2048
      %52 = vsyncadd [#allocation9], %s51
      %s53 = sshll.u32 [#allocation8], 4
      %s54 = int_to_ptr.vmem [resolvable:$true] %s53
      %59 = dma.hbm_to_vmem [thread:$0]  %s3, 2048, %s54, [#allocation9], 128, 128, 8
    $region17: #{tpu_custom_call.1} parent=1 // pred_fallthru
      _
    // Predicated region
    $region18: #{tpu_custom_call.1} parent=1 // pred_check
      _
    $region19: #{tpu_custom_call.1} parent=1 // pred_check_branch
      %61 = sbr.rel (0) target = $region21
    $region20: #{tpu_custom_call.1} parent=1 // pred_region
      %s63 = ssub.s32 128, 128
      %64 = vsyncadd [#allocation9], %s63
      %s66 = sshll.u32 [#allocation10], 4
      %s67 = int_to_ptr.vmem [resolvable:$true] %s66
      %69 = dma.hbm_to_vmem [thread:$0]  %s4, 128, %s67, [#allocation9]
    $region21: #{tpu_custom_call.1} parent=1 // pred_fallthru
      _
    // Predicated region
    $region22: #{tpu_custom_call.1} parent=1 // pred_check
      _
    $region23: #{tpu_custom_call.1} parent=1 // pred_check_branch
      %71 = sbr.rel (0) target = $region25
    $region24: #{tpu_custom_call.1} parent=1 // pred_region
      %72 = dma.done [#allocation3], 128
    $region25: #{tpu_custom_call.1} parent=1 // pred_fallthru
      _
    // Predicated region
    $region26: #{tpu_custom_call.1} parent=1 // pred_check
      _
    $region27: #{tpu_custom_call.1} parent=1 // pred_check_branch
      %74 = sbr.rel (0) target = $region29
    $region28: #{tpu_custom_call.1} parent=1 // pred_region
      %75 = dma.done [#allocation6], 256
    $region29: #{tpu_custom_call.1} parent=1 // pred_fallthru
      _
    // Predicated region
    $region30: #{tpu_custom_call.1} parent=1 // pred_check
      _
    $region31: #{tpu_custom_call.1} parent=1 // pred_check_branch
      %77 = sbr.rel (0) target = $region33
    $region32: #{tpu_custom_call.1} parent=1 // pred_region
      %78 = dma.done [#allocation6], 2048
    $region33: #{tpu_custom_call.1} parent=1 // pred_fallthru
      _
    // Predicated region
    $region34: #{tpu_custom_call.1} parent=1 // pred_check
      _
    $region35: #{tpu_custom_call.1} parent=1 // pred_check_branch
      %80 = sbr.rel (0) target = $region37
    $region36: #{tpu_custom_call.1} parent=1 // pred_region
      %81 = dma.done [#allocation9], 2048
    $region37: #{tpu_custom_call.1} parent=1 // pred_fallthru
      _
    // Predicated region
    $region38: #{tpu_custom_call.1} parent=1 // pred_check
      _
    $region39: #{tpu_custom_call.1} parent=1 // pred_check_branch
      %83 = sbr.rel (0) target = $region41
    $region40: #{tpu_custom_call.1} parent=1 // pred_region
      %84 = dma.done [#allocation9], 128
    $region41: #{tpu_custom_call.1} parent=1 // pred_fallthru
      _
    %v85 = vld [vmem:[#allocation2] sm:$0xff]
    %v86 = vld [vmem:[#allocation10] sm:$0xff]
    %v87 = vld [vmem:[#allocation5] sm:$0xff]
    %v88 = vld [vmem:[#allocation5 + $0x8] sm:$0xff]
    %v89 = vlaneseq
    %v90 = vshrl.u32 %v89, 7
    %v91 = vsub.s32 0, %v90
    %v92 = vrot.slane %v86, %v91
    %vm93 = vcmask 130048
    %v95 = vsel %vm93, %v85, 0
    %97 = vmatprep.subr.mxu0 0.0
    %98 = vmatpush1.msra.mxu0 0.0
    %99 = vmatprep.subr.mxu0 0.0
    %100 = vmatpush1.msra.mxu0 0.0
    %101 = vmatprep.subr.mxu0 0.0
    %102 = vmatpush1.msra.mxu0 0.0
    %103 = vmatprep.subr.mxu0 0.0
    %104 = vmatpush1.msra.mxu0 0.0
    %105 = vmatprep.subr.mxu0 0.0
    %106 = vmatpush1.msra.mxu0 0.0
    %107 = vmatprep.subr.mxu0 0.0
    %108 = vmatpush1.msra.mxu0 0.0
    %109 = vmatprep.subr.mxu0 0.0
    %110 = vmatpush1.msra.mxu0 0.0
    %111 = vmatprep.subr.mxu0 0.0
    %112 = vmatpush1.msra.mxu0 0.0
    %113 = vmatprep.subr.mxu0 0.0
    %114 = vmatpush1.msra.mxu0 0.0
    %115 = vmatprep.subr.mxu0 0.0
    %116 = vmatpush1.msra.mxu0 0.0
    %117 = vmatprep.subr.mxu0 0.0
    %118 = vmatpush1.msra.mxu0 0.0
    %119 = vmatprep.subr.mxu0 0.0
    %120 = vmatpush1.msra.mxu0 0.0
    %121 = vmatprep.subr.mxu0 0.0
    %122 = vmatpush1.msra.mxu0 0.0
    %123 = vmatprep.subr.mxu0 0.0
    %124 = vmatpush1.msra.mxu0 0.0
    %125 = vmatprep.subr.mxu0 0.0
    %126 = vmatpush1.msra.mxu0 %v88
    %127 = vmatprep.subr.mxu0 0.0
    %128 = vmatpush1.msra.mxu0 %v87
    %129 = vmatprep.subr.mxu0 0.0
    %130 = vmatpush2.msra.mxu0 0.0
    %131 = vmatprep.subr.mxu0 0.0
    %132 = vmatpush2.msra.mxu0 0.0
    %133 = vmatprep.subr.mxu0 0.0
    %134 = vmatpush2.msra.mxu0 0.0
    %135 = vmatprep.subr.mxu0 0.0
    %136 = vmatpush2.msra.mxu0 0.0
    %137 = vmatprep.subr.mxu0 0.0
    %138 = vmatpush2.msra.mxu0 0.0
    %139 = vmatprep.subr.mxu0 0.0
    %140 = vmatpush2.msra.mxu0 0.0
    %141 = vmatprep.subr.mxu0 0.0
    %142 = vmatpush2.msra.mxu0 0.0
    %143 = vmatprep.subr.mxu0 0.0
    %144 = vmatpush2.msra.mxu0 0.0
    %145 = vmatprep.subr.mxu0 0.0
    %146 = vmatpush2.msra.mxu0 0.0
    %147 = vmatprep.subr.mxu0 0.0
    %148 = vmatpush2.msra.mxu0 0.0
    %149 = vmatprep.subr.mxu0 0.0
    %150 = vmatpush2.msra.mxu0 0.0
    %151 = vmatprep.subr.mxu0 0.0
    %152 = vmatpush2.msra.mxu0 0.0
    %153 = vmatprep.subr.mxu0 0.0
    %154 = vmatpush2.msra.mxu0 0.0
    %155 = vmatprep.subr.mxu0 0.0
    %156 = vmatpush2.msra.mxu0 0.0
    %157 = vmatprep.subr.mxu0 0.0
    %158 = vmatpush2.msra.mxu0 0.0
    %159 = vmatprep.subr.mxu0 0.0
    %160 = vmatpush2.msra.mxu0 0.0
    %161 = vmatprep.mubr.f32.mxu0 0.0
    %162 = vmatmul.mubr.f32.gmra.mxu0 %v95
    %v163 = vpop.f32.mrf.mxu0
    %v164 = vadd.f32 %v92, %v163
    %v165 = vpop.f32.mrf.mxu0
    %166 = vdwg.mxu0
    %167 = vadd.xlane.f32.xlu0 %v164
    %v168 = vpop.xlane.xlu0 %167
    %v169 = vmul.f32 %v164, %v164
    %170 = vadd.xlane.f32.xlu0 %v169
    %v171 = vpop.xlane.xlu0 %170
    %v172 = vmul.f32 %v168, 0.03125
    %v173 = vmul.f32 %v171, 0.03125
    %v174 = vmul.f32 %v172, %v172
    %v175 = vsub.f32 %v173, %v174
    %v176 = vmax.f32 %v175, 0.0
    %v177 = vsub.f32 %v164, %v172
    %v178 = vadd.f32 %v176, 1e-05
    %v179 = vrsqrt.pop %v178
    %v180 = vmul.f32 %v177, %v179
    %v181 = vlaneseq
    %v182 = vshrl.u32 %v181, 7
    %v183 = vsub.s32 1, %v182
    %v184 = vrot.slane %v86, %v183
    %v185 = vmul.f32 %v180, %v184
    %v186 = vlaneseq
    %v187 = vshrl.u32 %v186, 7
    %v188 = vsub.s32 2, %v187
    %v189 = vrot.slane %v86, %v188
    %v190 = vadd.f32 %v185, %v189
    %v191 = vmax.f32 %v190, 0.0
    %v192 = vld [vmem:[#allocation7] sm:$0xff]
    %v193 = vld [vmem:[#allocation7 + $0x8] sm:$0xff]
    %v194 = vld [vmem:[#allocation7 + $0x10] sm:$0xff]
    %v195 = vld [vmem:[#allocation7 + $0x18] sm:$0xff]
    %v196 = vld [vmem:[#allocation7 + $0x20] sm:$0xff]
    %v197 = vld [vmem:[#allocation7 + $0x28] sm:$0xff]
    %v198 = vld [vmem:[#allocation7 + $0x30] sm:$0xff]
    %v199 = vld [vmem:[#allocation7 + $0x38] sm:$0xff]
    %v200 = vld [vmem:[#allocation7 + $0x40] sm:$0xff]
    %v201 = vld [vmem:[#allocation7 + $0x48] sm:$0xff]
    %v202 = vld [vmem:[#allocation7 + $0x50] sm:$0xff]
    %v203 = vld [vmem:[#allocation7 + $0x58] sm:$0xff]
    %v204 = vld [vmem:[#allocation7 + $0x60] sm:$0xff]
    %v205 = vld [vmem:[#allocation7 + $0x68] sm:$0xff]
    %v206 = vld [vmem:[#allocation7 + $0x70] sm:$0xff]
    %v207 = vld [vmem:[#allocation7 + $0x78] sm:$0xff]
    %v208 = vlaneseq
    %v209 = vshrl.u32 %v208, 7
    %v210 = vsub.s32 3, %v209
    %v211 = vrot.slane %v86, %v210
    %212 = vmatprep.subr.mxu0 0.0
    %213 = vmatpush1.msra.mxu0 %v207
    %214 = vmatprep.subr.mxu0 0.0
    %215 = vmatpush1.msra.mxu0 %v206
    %216 = vmatprep.subr.mxu0 0.0
    %217 = vmatpush1.msra.mxu0 %v205
    %218 = vmatprep.subr.mxu0 0.0
    %219 = vmatpush1.msra.mxu0 %v204
    %220 = vmatprep.subr.mxu0 0.0
    %221 = vmatpush1.msra.mxu0 %v203
    %222 = vmatprep.subr.mxu0 0.0
    %223 = vmatpush1.msra.mxu0 %v202
    %224 = vmatprep.subr.mxu0 0.0
    %225 = vmatpush1.msra.mxu0 %v201
    %226 = vmatprep.subr.mxu0 0.0
    %227 = vmatpush1.msra.mxu0 %v200
    %228 = vmatprep.subr.mxu0 0.0
    %229 = vmatpush1.msra.mxu0 %v199
    %230 = vmatprep.subr.mxu0 0.0
    %231 = vmatpush1.msra.mxu0 %v198
    %232 = vmatprep.subr.mxu0 0.0
    %233 = vmatpush1.msra.mxu0 %v197
    %234 = vmatprep.subr.mxu0 0.0
    %235 = vmatpush1.msra.mxu0 %v196
    %236 = vmatprep.subr.mxu0 0.0
    %237 = vmatpush1.msra.mxu0 %v195
    %238 = vmatprep.subr.mxu0 0.0
    %239 = vmatpush1.msra.mxu0 %v194
    %240 = vmatprep.subr.mxu0 0.0
    %241 = vmatpush1.msra.mxu0 %v193
    %242 = vmatprep.subr.mxu0 0.0
    %243 = vmatpush1.msra.mxu0 %v192
    %244 = vmatprep.subr.mxu0 0.0
    %245 = vmatpush2.msra.mxu0 0.0
    %246 = vmatprep.subr.mxu0 0.0
    %247 = vmatpush2.msra.mxu0 0.0
    %248 = vmatprep.subr.mxu0 0.0
    %249 = vmatpush2.msra.mxu0 0.0
    %250 = vmatprep.subr.mxu0 0.0
    %251 = vmatpush2.msra.mxu0 0.0
    %252 = vmatprep.subr.mxu0 0.0
    %253 = vmatpush2.msra.mxu0 0.0
    %254 = vmatprep.subr.mxu0 0.0
    %255 = vmatpush2.msra.mxu0 0.0
    %256 = vmatprep.subr.mxu0 0.0
    %257 = vmatpush2.msra.mxu0 0.0
    %258 = vmatprep.subr.mxu0 0.0
    %259 = vmatpush2.msra.mxu0 0.0
    %260 = vmatprep.subr.mxu0 0.0
    %261 = vmatpush2.msra.mxu0 0.0
    %262 = vmatprep.subr.mxu0 0.0
    %263 = vmatpush2.msra.mxu0 0.0
    %264 = vmatprep.subr.mxu0 0.0
    %265 = vmatpush2.msra.mxu0 0.0
    %266 = vmatprep.subr.mxu0 0.0
    %267 = vmatpush2.msra.mxu0 0.0
    %268 = vmatprep.subr.mxu0 0.0
    %269 = vmatpush2.msra.mxu0 0.0
    %270 = vmatprep.subr.mxu0 0.0
    %271 = vmatpush2.msra.mxu0 0.0
    %272 = vmatprep.subr.mxu0 0.0
    %273 = vmatpush2.msra.mxu0 0.0
    %274 = vmatprep.subr.mxu0 0.0
    %275 = vmatpush2.msra.mxu0 0.0
    %276 = vmatprep.mubr.f32.mxu0 0.0
    %277 = vmatmul.mubr.f32.gmra.mxu0 %v191
    %v278 = vpop.f32.mrf.mxu0
    %v279 = vadd.f32 %v211, %v278
    %v280 = vpop.f32.mrf.mxu0
    %281 = vdwg.mxu0
    %282 = vadd.xlane.f32.xlu0 %v279
    %v283 = vpop.xlane.xlu0 %282
    %v284 = vmul.f32 %v279, %v279
    %285 = vadd.xlane.f32.xlu0 %v284
    %v286 = vpop.xlane.xlu0 %285
    %v287 = vmul.f32 %v283, 0.03125
    %v288 = vmul.f32 %v286, 0.03125
    %v289 = vmul.f32 %v287, %v287
    %v290 = vsub.f32 %v288, %v289
    %v291 = vmax.f32 %v290, 0.0
    %v292 = vsub.f32 %v279, %v287
    %v293 = vadd.f32 %v291, 1e-05
    %v294 = vrsqrt.pop %v293
    %v295 = vmul.f32 %v292, %v294
    %v296 = vlaneseq
    %v297 = vshrl.u32 %v296, 7
    %v298 = vsub.s32 4, %v297
    %v299 = vrot.slane %v86, %v298
    %v300 = vmul.f32 %v295, %v299
    %v301 = vlaneseq
    %v302 = vshrl.u32 %v301, 7
    %v303 = vsub.s32 5, %v302
    %v304 = vrot.slane %v86, %v303
    %v305 = vadd.f32 %v300, %v304
    %v306 = vmax.f32 %v305, 0.0
    %v307 = vld [vmem:[#allocation8] sm:$0xff]
    %v308 = vld [vmem:[#allocation8 + $0x8] sm:$0xff]
    %v309 = vld [vmem:[#allocation8 + $0x10] sm:$0xff]
    %v310 = vld [vmem:[#allocation8 + $0x18] sm:$0xff]
    %v311 = vld [vmem:[#allocation8 + $0x20] sm:$0xff]
    %v312 = vld [vmem:[#allocation8 + $0x28] sm:$0xff]
    %v313 = vld [vmem:[#allocation8 + $0x30] sm:$0xff]
    %v314 = vld [vmem:[#allocation8 + $0x38] sm:$0xff]
    %v315 = vld [vmem:[#allocation8 + $0x40] sm:$0xff]
    %v316 = vld [vmem:[#allocation8 + $0x48] sm:$0xff]
    %v317 = vld [vmem:[#allocation8 + $0x50] sm:$0xff]
    %v318 = vld [vmem:[#allocation8 + $0x58] sm:$0xff]
    %v319 = vld [vmem:[#allocation8 + $0x60] sm:$0xff]
    %v320 = vld [vmem:[#allocation8 + $0x68] sm:$0xff]
    %v321 = vld [vmem:[#allocation8 + $0x70] sm:$0xff]
    %v322 = vld [vmem:[#allocation8 + $0x78] sm:$0xff]
    %v323 = vlaneseq
    %v324 = vshrl.u32 %v323, 7
    %v325 = vsub.s32 6, %v324
    %v326 = vrot.slane %v86, %v325
    %327 = vmatprep.subr.mxu0 0.0
    %328 = vmatpush1.msra.mxu0 %v322
    %329 = vmatprep.subr.mxu0 0.0
    %330 = vmatpush1.msra.mxu0 %v321
    %331 = vmatprep.subr.mxu0 0.0
    %332 = vmatpush1.msra.mxu0 %v320
    %333 = vmatprep.subr.mxu0 0.0
    %334 = vmatpush1.msra.mxu0 %v319
    %335 = vmatprep.subr.mxu0 0.0
    %336 = vmatpush1.msra.mxu0 %v318
    %337 = vmatprep.subr.mxu0 0.0
    %338 = vmatpush1.msra.mxu0 %v317
    %339 = vmatprep.subr.mxu0 0.0
    %340 = vmatpush1.msra.mxu0 %v316
    %341 = vmatprep.subr.mxu0 0.0
    %342 = vmatpush1.msra.mxu0 %v315
    %343 = vmatprep.subr.mxu0 0.0
    %344 = vmatpush1.msra.mxu0 %v314
    %345 = vmatprep.subr.mxu0 0.0
    %346 = vmatpush1.msra.mxu0 %v313
    %347 = vmatprep.subr.mxu0 0.0
    %348 = vmatpush1.msra.mxu0 %v312
    %349 = vmatprep.subr.mxu0 0.0
    %350 = vmatpush1.msra.mxu0 %v311
    %351 = vmatprep.subr.mxu0 0.0
    %352 = vmatpush1.msra.mxu0 %v310
    %353 = vmatprep.subr.mxu0 0.0
    %354 = vmatpush1.msra.mxu0 %v309
    %355 = vmatprep.subr.mxu0 0.0
    %356 = vmatpush1.msra.mxu0 %v308
    %357 = vmatprep.subr.mxu0 0.0
    %358 = vmatpush1.msra.mxu0 %v307
    %359 = vmatprep.subr.mxu0 0.0
    %360 = vmatpush2.msra.mxu0 0.0
    %361 = vmatprep.subr.mxu0 0.0
    %362 = vmatpush2.msra.mxu0 0.0
    %363 = vmatprep.subr.mxu0 0.0
    %364 = vmatpush2.msra.mxu0 0.0
    %365 = vmatprep.subr.mxu0 0.0
    %366 = vmatpush2.msra.mxu0 0.0
    %367 = vmatprep.subr.mxu0 0.0
    %368 = vmatpush2.msra.mxu0 0.0
    %369 = vmatprep.subr.mxu0 0.0
    %370 = vmatpush2.msra.mxu0 0.0
    %371 = vmatprep.subr.mxu0 0.0
    %372 = vmatpush2.msra.mxu0 0.0
    %373 = vmatprep.subr.mxu0 0.0
    %374 = vmatpush2.msra.mxu0 0.0
    %375 = vmatprep.subr.mxu0 0.0
    %376 = vmatpush2.msra.mxu0 0.0
    %377 = vmatprep.subr.mxu0 0.0
    %378 = vmatpush2.msra.mxu0 0.0
    %379 = vmatprep.subr.mxu0 0.0
    %380 = vmatpush2.msra.mxu0 0.0
    %381 = vmatprep.subr.mxu0 0.0
    %382 = vmatpush2.msra.mxu0 0.0
    %383 = vmatprep.subr.mxu0 0.0
    %384 = vmatpush2.msra.mxu0 0.0
    %385 = vmatprep.subr.mxu0 0.0
    %386 = vmatpush2.msra.mxu0 0.0
    %387 = vmatprep.subr.mxu0 0.0
    %388 = vmatpush2.msra.mxu0 0.0
    %389 = vmatprep.subr.mxu0 0.0
    %390 = vmatpush2.msra.mxu0 0.0
    %391 = vmatprep.mubr.f32.mxu0 0.0
    %392 = vmatmul.mubr.f32.gmra.mxu0 %v306
    %v393 = vpop.f32.mrf.mxu0
    %v394 = vadd.f32 %v326, %v393
    %v395 = vpop.f32.mrf.mxu0
    %396 = vdwg.mxu0
    %v397 = vtanh.pop %v394
    %398 = vst [vmem:[#allocation11] sm:$0xff] %v397
    // Predicated region
    $region42: #{tpu_custom_call.1} parent=1 // pred_check
      _
    $region43: #{tpu_custom_call.1} parent=1 // pred_check_branch
      %400 = sbr.rel (0) target = $region45
    $region44: #{tpu_custom_call.1} parent=1 // pred_region
      %s402 = ssub.s32 128, 128
      %403 = vsyncadd [#allocation4], %s402
      %s405 = sshll.u32 [#allocation11], 4
      %s406 = int_to_ptr.vmem [resolvable:$true] %s405
      %408 = dma.vmem_to_hbm [thread:$0]  %s406, 128, %s5, [#allocation4]
    $region45: #{tpu_custom_call.1} parent=1 // pred_fallthru
      _
    // Predicated region
    $region46: #{tpu_custom_call.1} parent=1 // pred_check
      _
    $region47: #{tpu_custom_call.1} parent=1 // pred_check_branch
      %410 = sbr.rel (0) target = $region49
    $region48: #{tpu_custom_call.1} parent=1 // pred_region
      %411 = dma.done [#allocation4], 128
    $region49: #{tpu_custom_call.1} parent=1 // pred_fallthru
      _
    %412 = vsyncpa [#allocation3], 1
    %413 = vsyncpa [#allocation6], 1
    %414 = vsyncpa [#allocation9], 1
    %415 = vsyncpa [#allocation4], 1

</llo_original>
